<compile_context>
chip_gen: v6e
topology: v6e:2x2x1
jax: 0.10.0
libtpu: 0.0.40
codegen_flags: <defaults>
</compile_context>

<pallas_src>
import math
import functools

import jax
import jax.numpy as jnp
from jax.experimental import pallas as pl
from jax.experimental.pallas import tpu as pltpu


# ----------------------------------------------------------------------------
# Buffer construction (mirrors the torch __init__, deterministic, plain JAX)
# ----------------------------------------------------------------------------
def make_positional_encoding(d_model: int, max_len: int = 1024,
                             scale_factor: float = 1.0) -> jnp.ndarray:
    """Returns pe with shape [max_len, 1, d_model], matching the torch buffer."""
    position = jnp.arange(0, max_len, dtype=jnp.float32)[:, None]            # (L, 1)
    div_term = jnp.exp(jnp.arange(0, d_model, 2, dtype=jnp.float32)
                       * (-math.log(10000.0) / d_model))                     # (D/2,)
    pe = jnp.zeros((max_len, d_model), dtype=jnp.float32)
    pe = pe.at[:, 0::2].set(jnp.sin(position * div_term))
    pe = pe.at[:, 1::2].set(jnp.cos(position * div_term))
    return scale_factor * pe[:, None, :]                                     # (L, 1, D)


# ----------------------------------------------------------------------------
# Pallas kernel: out = dropout(x + pe)
# ----------------------------------------------------------------------------
def _pe_add_dropout_kernel(*refs, use_dropout: bool, expand_pe: bool,
                           threshold: int, scale: float):
    if use_dropout:
        x_ref, pe_ref, bits_ref, o_ref = refs
    else:
        x_ref, pe_ref, o_ref = refs

    pe = pe_ref[...]                          # (tile_s, D) if expand_pe else (tile_s, BD)
    if expand_pe:
        pe = pe[:, None, :]                   # broadcast over the batch axis

    # Add in f32 (exact for f32 inputs; keeps precision for bf16 I/O).
    val = x_ref[...].astype(jnp.float32) + pe

    if use_dropout:
        # Inverted dropout: keep with prob (1 - p) via integer-threshold compare
        # on raw uint32 bits (no shift / int->float convert / float mul).
        keep = bits_ref[...] >= jnp.uint32(threshold)
        val = jnp.where(keep, val * jnp.float32(scale), jnp.zeros_like(val))

    o_ref[...] = val.astype(o_ref.dtype)


def _choose_tile_s(S: int, row_bytes: int, need_mult8: bool,
                   target_bytes: int = 2 << 20, min_steps: int = 8) -> int:
    """Largest divisor of S whose block stays ~<=2 MiB, preferring >=8 grid steps."""
    cap = max(1, target_bytes // max(row_bytes, 1))
    # Prefer at least `min_steps` steps while each block still carries >= ~512 KiB,
    # so double-buffering (and megacore sharding on v7x) has work to overlap.
    min_rows = max(1, (512 * 1024) // max(row_bytes, 1))
    if S >= min_steps * min_rows:
        cap = min(cap, max(min_rows, S // min_steps))
    if S <= cap:
        return S
    for t in range(min(cap, S), 0, -1):
        if S % t != 0:
            continue
        if need_mult8 and t % 8 != 0:
            continue
        return t
    return S  # no suitable divisor: fall back to a single block


def fixed_positional_encoding(x: jnp.ndarray,
                              pe: jnp.ndarray,
                              *,
                              dropout_p: float = 0.1,
                              training: bool = False,
                              rng_key=None,
                              tile_s: int | None = None) -> jnp.ndarray:
    """x: [S, B, D]; pe: [max_len, 1, D]. Returns dropout(x + pe[:S]) of shape [S, B, D]."""
    S, B, D = x.shape
    assert pe.shape[0] >= S and pe.shape[-1] == D

    use_dropout = bool(training) and dropout_p > 0.0
    if use_dropout:
        assert 0.0 < dropout_p < 1.0
        if rng_key is None:
            rng_key = jax.random.PRNGKey(0)
        # TODO(synk): dropout mask uses JAX's counter-based RNG (deterministic per key,
        # independent of tiling); it cannot reproduce PyTorch's dropout RNG stream bit-exactly.
        bits = jax.random.bits(rng_key, (S, B, D), dtype=jnp.uint32)
        threshold = min(int(round(dropout_p * 2.0 ** 32)), 2 ** 32 - 1)
        scale = 1.0 / (1.0 - dropout_p)
    else:
        bits = None
        threshold = 0
        scale = 1.0

    itemsize = jnp.dtype(x.dtype).itemsize
    lane_dense = (D % 128 == 0)

    if lane_dense:
        # 3-D layout: last two block dims (B, D) are full; D is already lane-dense.
        # pe keeps its cheap (S, 1, D) footprint and is broadcast inside the kernel.
        x_in = x
        pe_in = pe[:S].astype(jnp.float32)                                   # (S, 1, D)
        bits_in = bits
        row_bytes = B * D * itemsize
        if tile_s is None:
            tile_s = _choose_tile_s(S, row_bytes, need_mult8=False)
        assert S % tile_s == 0, "tile_s must divide S"
        x_spec = pl.BlockSpec((tile_s, B, D), lambda i: (i, 0, 0))
        pe_spec = pl.BlockSpec((tile_s, None, D), lambda i: (i, 0, 0))       # squeezed batch dim
        out_shape = jax.ShapeDtypeStruct((S, B, D), x.dtype)
        expand_pe = True
    else:
        # D not a multiple of 128 -> flatten (B, D) so stores are unmasked, lane-dense.
        BD = B * D
        x_in = x.reshape(S, BD)
        pe_in = jnp.broadcast_to(pe[:S].astype(jnp.float32), (S, B, D)).reshape(S, BD)
        bits_in = bits.reshape(S, BD) if use_dropout else None
        row_bytes = BD * itemsize
        if tile_s is None:
            tile_s = _choose_tile_s(S, row_bytes, need_mult8=True)
        assert S % tile_s == 0, "tile_s must divide S"
        x_spec = pl.BlockSpec((tile_s, BD), lambda i: (i, 0))
        pe_spec = pl.BlockSpec((tile_s, BD), lambda i: (i, 0))
        out_shape = jax.ShapeDtypeStruct((S, BD), x.dtype)
        expand_pe = False

    grid = (S // tile_s,)
    in_specs = [x_spec, pe_spec]
    args = [x_in, pe_in]
    if use_dropout:
        in_specs.append(x_spec)       # bits tiled exactly like x
        args.append(bits_in)

    kernel = functools.partial(_pe_add_dropout_kernel,
                               use_dropout=use_dropout,
                               expand_pe=expand_pe,
                               threshold=threshold,
                               scale=scale)

    out = pl.pallas_call(
        kernel,
        out_shape=out_shape,
        grid=grid,
        in_specs=in_specs,
        out_specs=x_spec,
        compiler_params=pltpu.CompilerParams(
            # Each step is fully independent -> shard across both TCs on v7x.
            dimension_semantics=("parallel",),
        ),
    )(*args)

    return out if lane_dense else out.reshape(S, B, D)


# ----------------------------------------------------------------------------
# Demo / sanity checks
# ----------------------------------------------------------------------------
if __name__ == "__main__":
    # Shapes implied by forward: x = [seq_len, batch, embed_dim]
    S, B, D = 8, 2, 32
    max_len = 64

    key = jax.random.PRNGKey(0)
    x = jax.random.normal(key, (S, B, D), dtype=jnp.float32)
    pe = make_positional_encoding(D, max_len=max_len, scale_factor=1.0)
    ref = x + pe[:S]

    # Eval-mode forward (dropout = identity), matches PyTorch module.eval()
    out_eval = jax.block_until_ready(
        fixed_positional_encoding(x, pe, dropout_p=0.1, training=False))
    assert out_eval.shape == (S, B, D)
    assert jnp.allclose(out_eval, ref, atol=1e-6), "eval mismatch vs reference"

    # Training-mode forward (inverted dropout, deterministic given rng_key)
    p = 0.1
    out_train = jax.block_until_ready(
        fixed_positional_encoding(x, pe, dropout_p=p, training=True,
                                  rng_key=jax.random.PRNGKey(1234)))
    assert out_train.shape == (S, B, D)
    kept = out_train != 0
    assert jnp.allclose(jnp.where(kept, out_train, 0.0),
                        jnp.where(kept, ref / (1.0 - p), 0.0), atol=1e-5), \
        "kept values must equal (x + pe) / (1 - p)"

    # Exercise the lane-dense 3-D path (D multiple of 128) as well.
    S2, B2, D2 = 16, 2, 128
    x2 = jax.random.normal(jax.random.PRNGKey(2), (S2, B2, D2), dtype=jnp.float32)
    pe2 = make_positional_encoding(D2, max_len=32)
    out2 = jax.block_until_ready(
        fixed_positional_encoding(x2, pe2, dropout_p=0.1, training=False))
    assert jnp.allclose(out2, x2 + pe2[:S2], atol=1e-6), "3-D path mismatch"

    print("KERNEL_OK")
</pallas_src>

<mosaic_0001>
module attributes {stable_mosaic.version = 11 : i64} {
  func.func @_pe_add_dropout_kernel(%arg0: i32, %arg1: memref<8x64xf32, #tpu.memory_space<vmem>>, %arg2: memref<8x64xf32, #tpu.memory_space<vmem>>, %arg3: memref<8x64xf32, #tpu.memory_space<vmem>>) attributes {dimension_semantics = [#tpu.dimension_semantics<parallel>], iteration_bounds = array<i64: 1>, scalar_prefetch = 0 : i64, scratch_operands = 0 : i64, tpu.core_type = #tpu.core_type<tc>, window_params = [{transform_indices = @transform_0, window_bounds = array<i64: 8, 64>}, {transform_indices = @transform_1, window_bounds = array<i64: 8, 64>}, {transform_indices = @transform_2, window_bounds = array<i64: 8, 64>}]} {
    %c0 = arith.constant 0 : index
    %c0_0 = arith.constant 0 : index
    %0 = vector.load %arg2[%c0, %c0_0] : memref<8x64xf32, #tpu.memory_space<vmem>>, vector<8x64xf32>
    %c0_1 = arith.constant 0 : index
    %c0_2 = arith.constant 0 : index
    %1 = vector.load %arg1[%c0_1, %c0_2] : memref<8x64xf32, #tpu.memory_space<vmem>>, vector<8x64xf32>
    %2 = arith.addf %1, %0 : vector<8x64xf32>
    %c0_3 = arith.constant 0 : index
    %c0_4 = arith.constant 0 : index
    %3 = vector.load %arg3[%c0_3, %c0_4] : memref<8x64xf32, #tpu.memory_space<vmem>>, vector<8x64xf32>
    tpu.vector_store %arg3[%c0_3, %c0_4], %2 {strides = array<i32>} : memref<8x64xf32, #tpu.memory_space<vmem>>, vector<8x64xf32>,
    return
  }
  func.func @transform_0(%arg0: i32) -> (i32, i32) {
    %c0_i32 = arith.constant 0 : i32
    %c0_i32_0 = arith.constant 0 : i32
    return %arg0, %c0_i32 : i32, i32
  }
  func.func @transform_1(%arg0: i32) -> (i32, i32) {
    %c0_i32 = arith.constant 0 : i32
    %c0_i32_0 = arith.constant 0 : i32
    return %arg0, %c0_i32 : i32, i32
  }
  func.func @transform_2(%arg0: i32) -> (i32, i32) {
    %c0_i32 = arith.constant 0 : i32
    %c0_i32_0 = arith.constant 0 : i32
    return %arg0, %c0_i32 : i32, i32
  }
}

</mosaic_0001>

<llo_original>
// kernel: tpu_custom_call.1
$region0: #{tpu_custom_call.1}
  #allocation0 [shape = 'u32[]', space=smem, size = 0x4, offset = 0x4, fixed_abs, tag = 'smem constant byte address 0x4 - core index']
  #allocation1 [shape = 'u32[144,128]{1,0:T(1,128)}', space=vmem, size = 0x12000, scoped, tag = 'internal scratch']
  %s0 = inlined_call_operand.hbm [shape: f32[8,64], index: 0, kind: input, shape index: {}]
  %s1 = inlined_call_operand.hbm [shape: f32[8,64], index: 1, kind: input, shape index: {}]
  %s2 = inlined_call_operand.hbm [shape: f32[8,64], index: 2, kind: output, shape index: {}]
  %s3 = sld [smem:[#allocation0]]
  $region26: #{tpu_custom_call.1} parent=0
    _
  %s5 = ssub.s32 1, %s3
  %s6 = scalar_select 0, %s5, %s3
  $region1: #{tpu_custom_call.1} parent=0
    #allocation2 [shape = 'u8[4096]{0}', space=vmem, size = 0x1000, scoped, tag = 'input window, operand 0, single buffered']
    #allocation3 [shape = 's32[1]{0}', space=sflag, size = 0x4, scoped, tag = 'scoped memory for tpu_custom_call.1']
    #allocation4 [shape = 's32[1]{0}', space=sflag, size = 0x4, scoped, tag = 'scoped memory for tpu_custom_call.1']
    #allocation5 [shape = 'u8[4096]{0}', space=vmem, size = 0x1000, scoped, tag = 'input window, operand 1, single buffered']
    #allocation6 [shape = 's32[1]{0}', space=sflag, size = 0x4, scoped, tag = 'scoped memory for tpu_custom_call.1']
    #allocation7 [shape = 'u8[4096]{0}', space=vmem, size = 0x1000, scoped, tag = 'output window, operand 0, single buffered']
    %7 = vsyncpa [#allocation3], 0
    %8 = vsyncpa [#allocation6], 0
    %9 = vsyncpa [#allocation4], 0
    // Predicated region
    $region2: #{tpu_custom_call.1} parent=1 // pred_check
      _
    $region3: #{tpu_custom_call.1} parent=1 // pred_check_branch
      %11 = sbr.rel (0) target = $region5
    $region4: #{tpu_custom_call.1} parent=1 // pred_region
      %s13 = ssub.s32 128, 128
      %14 = vsyncadd [#allocation3], %s13
      %s16 = sshll.u32 [#allocation2], 4
      %s17 = int_to_ptr.vmem [resolvable:$true] %s16
      %19 = dma.hbm_to_vmem [thread:$0]  %s0, 128, %s17, [#allocation3]
    $region5: #{tpu_custom_call.1} parent=1 // pred_fallthru
      _
    // Predicated region
    $region6: #{tpu_custom_call.1} parent=1 // pred_check
      _
    $region7: #{tpu_custom_call.1} parent=1 // pred_check_branch
      %21 = sbr.rel (0) target = $region9
    $region8: #{tpu_custom_call.1} parent=1 // pred_region
      %s23 = ssub.s32 128, 128
      %24 = vsyncadd [#allocation6], %s23
      %s26 = sshll.u32 [#allocation5], 4
      %s27 = int_to_ptr.vmem [resolvable:$true] %s26
      %29 = dma.hbm_to_vmem [thread:$0]  %s1, 128, %s27, [#allocation6]
    $region9: #{tpu_custom_call.1} parent=1 // pred_fallthru
      _
    // Predicated region
    $region10: #{tpu_custom_call.1} parent=1 // pred_check
      _
    $region11: #{tpu_custom_call.1} parent=1 // pred_check_branch
      %31 = sbr.rel (0) target = $region13
    $region12: #{tpu_custom_call.1} parent=1 // pred_region
      %32 = dma.done [#allocation3], 128
    $region13: #{tpu_custom_call.1} parent=1 // pred_fallthru
      _
    // Predicated region
    $region14: #{tpu_custom_call.1} parent=1 // pred_check
      _
    $region15: #{tpu_custom_call.1} parent=1 // pred_check_branch
      %34 = sbr.rel (0) target = $region17
    $region16: #{tpu_custom_call.1} parent=1 // pred_region
      %35 = dma.done [#allocation6], 128
    $region17: #{tpu_custom_call.1} parent=1 // pred_fallthru
      _
    %v36 = vld [vmem:[#allocation5] sm:$0xff]
    %v37 = vld [vmem:[#allocation2] sm:$0xff]
    %v38 = vadd.f32 %v37, %v36
    %vm39 = vcmask 523264
    %40 = vst.msk [vmem:[#allocation7] sm:$0xff] %vm39, %v38
    // Predicated region
    $region18: #{tpu_custom_call.1} parent=1 // pred_check
      _
    $region19: #{tpu_custom_call.1} parent=1 // pred_check_branch
      %42 = sbr.rel (0) target = $region21
    $region20: #{tpu_custom_call.1} parent=1 // pred_region
      %s44 = ssub.s32 128, 128
      %45 = vsyncadd [#allocation4], %s44
      %s47 = sshll.u32 [#allocation7], 4
      %s48 = int_to_ptr.vmem [resolvable:$true] %s47
      %50 = dma.vmem_to_hbm [thread:$0]  %s48, 128, %s2, [#allocation4]
    $region21: #{tpu_custom_call.1} parent=1 // pred_fallthru
      _
    // Predicated region
    $region22: #{tpu_custom_call.1} parent=1 // pred_check
      _
    $region23: #{tpu_custom_call.1} parent=1 // pred_check_branch
      %52 = sbr.rel (0) target = $region25
    $region24: #{tpu_custom_call.1} parent=1 // pred_region
      %53 = dma.done [#allocation4], 128
    $region25: #{tpu_custom_call.1} parent=1 // pred_fallthru
      _
    %54 = vsyncpa [#allocation3], 1
    %55 = vsyncpa [#allocation6], 1
    %56 = vsyncpa [#allocation4], 1

</llo_original>
